<compile_context>
chip_gen: v6e
topology: v6e:2x2x1
jax: 0.10.0
libtpu: 0.0.40
codegen_flags: <defaults>
</compile_context>

<pallas_src>
import jax
import jax.numpy as jnp
from jax.experimental import pallas as pl
from jax.experimental.pallas import tpu as pltpu


def _round_up(n, m):
    return (n + m - 1) // m * m


def _cdiv(a, b):
    return (a + b - 1) // b


def critic_kernel(x_ref, a_ref, w1x_ref, w1a_ref, w2_ref, misc_ref, b3_ref, o_ref):
    # misc packs [b1; b2; w3_row] as a (3, H) tile (single small DMA).
    b1 = misc_ref[0:1, :]   # (1, H)
    b2 = misc_ref[1:2, :]   # (1, H)
    w3 = misc_ref[2:3, :]   # (1, H) -- fc3 weight as a row

    # fc1 with the concat fused: cat([x, a]) @ w1 == x @ w1[:Dx] + a @ w1[Dx:]
    h1 = jnp.dot(x_ref[...], w1x_ref[...], preferred_element_type=jnp.float32)
    h1 = h1 + jnp.dot(a_ref[...], w1a_ref[...], preferred_element_type=jnp.float32)
    h1 = jnp.maximum(h1 + b1, 0.0)

    # fc2 + relu
    h2 = jnp.dot(h1, w2_ref[...], preferred_element_type=jnp.float32)
    h2 = jnp.maximum(h2 + b2, 0.0)

    # fc3 on the MXU, transposed: (1, H) contracted with (TB, H) over H ->
    # (1, TB).  Result is already lane-dense along the batch axis, so the
    # store is a packed 4-bytes-per-row write (no broadcast, no XLU reduce).
    q = jax.lax.dot_general(
        w3, h2,
        dimension_numbers=(((1,), (1,)), ((), ())),
        preferred_element_type=jnp.float32,
    )                                                    # (1, TB)
    o_ref[...] = (q + b3_ref[0, 0]).astype(o_ref.dtype)


def critic_forward(x, a, kparams, *, block_b=None):
    """x: [B, num_inputs], a: [B, num_actions] -> q: [B, 1] (float32)."""
    w1x, w1a, w2, misc, b3 = kparams
    B, Dx = x.shape
    Da = a.shape[1]
    H = w2.shape[0]

    # ---- batch tile selection (review items 1 & 2) ----
    if block_b is not None:
        TB = _round_up(max(1, min(block_b, B)), 8)
    elif B >= 256:
        # >= 2 grid steps so "parallel" batch axis can shard across both
        # TensorCores on megacore parts; cap tiles at 1024 rows.
        nsteps = max(2, _cdiv(B, 1024))
        TB = _round_up(_cdiv(B, nsteps), 128)
    else:
        # Small batch: one grid step, whole batch in a single tile.
        TB = _round_up(B, 8)
    B_pad = _round_up(B, TB)
    if B_pad // TB > 1 and TB % 128 != 0:
        # Multi-step grids need lane-dense (1, TB) output blocks.
        TB = _round_up(TB, 128)
        B_pad = _round_up(B, TB)
    nb = B_pad // TB

    if B_pad != B:
        x = jnp.pad(x, ((0, B_pad - B), (0, 0)))
        a = jnp.pad(a, ((0, B_pad - B), (0, 0)))

    out = pl.pallas_call(
        critic_kernel,
        out_shape=jax.ShapeDtypeStruct((1, B_pad), jnp.float32),
        grid=(nb,),
        in_specs=[
            pl.BlockSpec((TB, Dx), lambda i: (i, 0)),   # x tile   (streamed)
            pl.BlockSpec((TB, Da), lambda i: (i, 0)),   # a tile   (streamed)
            pl.BlockSpec((Dx, H), lambda i: (0, 0)),    # w1[:Dx]  (VMEM-resident)
            pl.BlockSpec((Da, H), lambda i: (0, 0)),    # w1[Dx:]  (VMEM-resident)
            pl.BlockSpec((H, H), lambda i: (0, 0)),     # w2       (VMEM-resident)
            pl.BlockSpec((3, H), lambda i: (0, 0)),     # [b1; b2; w3_row]
            pl.BlockSpec(memory_space=pltpu.MemorySpace.SMEM),  # b3 scalar
        ],
        # Packed q: each step writes a (1, TB) lane-dense slab of row 0.
        out_specs=pl.BlockSpec((1, TB), lambda i: (0, i)),
        compiler_params=pltpu.CompilerParams(
            dimension_semantics=("parallel",),
            vmem_limit_bytes=32 * 1024 * 1024),
    )(x, a, w1x, w1a, w2, misc, b3)

    return out[0, :B, None]


def init_params(key, num_inputs, num_actions, hidden_size):
    """PyTorch-nn.Linear-style init; weights stored [in_features, out_features]."""
    d_in = num_inputs + num_actions
    keys = jax.random.split(key, 6)

    def lin(kw, kb, fan_in, fan_out):
        bound = 1.0 / jnp.sqrt(fan_in)
        w = jax.random.uniform(kw, (fan_in, fan_out), jnp.float32, -bound, bound)
        b = jax.random.uniform(kb, (fan_out,), jnp.float32, -bound, bound)
        return w, b

    w1, b1 = lin(keys[0], keys[1], d_in, hidden_size)
    w2, b2 = lin(keys[2], keys[3], hidden_size, hidden_size)
    w3, b3 = lin(keys[4], keys[5], hidden_size, 1)
    return (w1, b1, w2, b2, w3, b3)


def pack_params(params, num_inputs):
    """One-time repack into the kernel layout (done outside the hot path)."""
    w1, b1, w2, b2, w3, b3 = params
    w1x = w1[:num_inputs]                          # (Dx, H)
    w1a = w1[num_inputs:]                          # (Da, H)
    misc = jnp.stack([b1, b2, w3[:, 0]], axis=0)   # (3, H): b1, b2, w3 row
    b3_arr = jnp.reshape(b3, (1, 1)).astype(jnp.float32)
    return (w1x, w1a, w2, misc, b3_arr)


def critic_reference(x, a, params):
    """Pure-JAX reference (full-precision matmuls) for verification."""
    w1, b1, w2, b2, w3, b3 = params
    hp = jax.lax.Precision.HIGHEST
    h = jnp.concatenate([x, a], axis=-1)
    h = jnp.maximum(jnp.dot(h, w1, precision=hp) + b1, 0.0)
    h = jnp.maximum(jnp.dot(h, w2, precision=hp) + b2, 0.0)
    return jnp.dot(h, w3, precision=hp) + b3


if __name__ == "__main__":
    # Small shapes consistent with the Critic module.
    num_inputs = 24
    num_actions = 8
    hidden_size = 32

    key = jax.random.PRNGKey(0)
    k1, k2, k3, k4, kp = jax.random.split(key, 5)
    params = init_params(kp, num_inputs, num_actions, hidden_size)
    kparams = pack_params(params, num_inputs)

    # Case 1: small batch -> single grid step (TB=24), exercises row padding.
    x1 = jax.random.normal(k1, (20, num_inputs), jnp.float32)
    a1 = jax.random.normal(k2, (20, num_actions), jnp.float32)
    q1 = jax.block_until_ready(critic_forward(x1, a1, kparams))

    # Case 2: larger batch -> TB=256, two "parallel" grid steps (megacore-able).
    x2 = jax.random.normal(k3, (300, num_inputs), jnp.float32)
    a2 = jax.random.normal(k4, (300, num_actions), jnp.float32)
    q2 = jax.block_until_ready(critic_forward(x2, a2, kparams))

    for x, a, q in ((x1, a1, q1), (x2, a2, q2)):
        q_ref = critic_reference(x, a, params)
        assert q.shape == (x.shape[0], 1)
        max_err = float(jnp.max(jnp.abs(q - q_ref)))
        # Default MXU matmul precision vs HIGHEST-precision reference.
        assert max_err < 5e-3, f"mismatch vs reference: max abs err {max_err}"

    print("KERNEL_OK")
</pallas_src>

<mosaic_0001>
module attributes {stable_mosaic.version = 11 : i64} {
  func.func @critic_kernel(%arg0: i32, %arg1: memref<24x24xf32, #tpu.memory_space<vmem>>, %arg2: memref<24x8xf32, #tpu.memory_space<vmem>>, %arg3: memref<24x32xf32, #tpu.memory_space<vmem>>, %arg4: memref<8x32xf32, #tpu.memory_space<vmem>>, %arg5: memref<32x32xf32, #tpu.memory_space<vmem>>, %arg6: memref<3x32xf32, #tpu.memory_space<vmem>>, %arg7: memref<1x1xf32, #tpu.memory_space<smem>>, %arg8: memref<1x24xf32, #tpu.memory_space<vmem>>) attributes {dimension_semantics = [#tpu.dimension_semantics<parallel>], iteration_bounds = array<i64: 1>, scalar_prefetch = 0 : i64, scratch_operands = 0 : i64, tpu.core_type = #tpu.core_type<tc>, window_params = [{transform_indices = @transform_0, window_bounds = array<i64: 24, 24>}, {transform_indices = @transform_1, window_bounds = array<i64: 24, 8>}, {pipeline_mode = #tpu.pipeline_mode<synchronous>, transform_indices = @transform_2, window_bounds = array<i64: 24, 32>}, {pipeline_mode = #tpu.pipeline_mode<synchronous>, transform_indices = @transform_3, window_bounds = array<i64: 8, 32>}, {pipeline_mode = #tpu.pipeline_mode<synchronous>, transform_indices = @transform_4, window_bounds = array<i64: 32, 32>}, {pipeline_mode = #tpu.pipeline_mode<synchronous>, transform_indices = @transform_5, window_bounds = array<i64: 3, 32>}, {transform_indices = @transform_6, window_bounds = array<i64: 1, 1>}, {transform_indices = @transform_7, window_bounds = array<i64: 1, 24>}]} {
    %c0 = arith.constant 0 : index
    %c0_0 = arith.constant 0 : index
    %0 = vector.load %arg6[%c0, %c0_0] : memref<3x32xf32, #tpu.memory_space<vmem>>, vector<1x32xf32>
    %c1 = arith.constant 1 : index
    %c0_1 = arith.constant 0 : index
    %1 = vector.load %arg6[%c1, %c0_1] : memref<3x32xf32, #tpu.memory_space<vmem>>, vector<1x32xf32>
    %c2 = arith.constant 2 : index
    %c0_2 = arith.constant 0 : index
    %2 = vector.load %arg6[%c2, %c0_2] : memref<3x32xf32, #tpu.memory_space<vmem>>, vector<1x32xf32>
    %c0_3 = arith.constant 0 : index
    %c0_4 = arith.constant 0 : index
    %3 = vector.load %arg1[%c0_3, %c0_4] : memref<24x24xf32, #tpu.memory_space<vmem>>, vector<24x24xf32>
    %c0_5 = arith.constant 0 : index
    %c0_6 = arith.constant 0 : index
    %4 = vector.load %arg3[%c0_5, %c0_6] : memref<24x32xf32, #tpu.memory_space<vmem>>, vector<24x32xf32>
    %cst = arith.constant dense<0.000000e+00> : vector<24x32xf32>
    %5 = tpu.matmul %3, %4, %cst {dimension_numbers = #tpu.dot_dimension_numbers<[1], [0], [0], [1], [0, 0, 1, 1], [], []>} : vector<24x24xf32>, vector<24x32xf32>, vector<24x32xf32> -> vector<24x32xf32>
    %c0_7 = arith.constant 0 : index
    %c0_8 = arith.constant 0 : index
    %6 = vector.load %arg2[%c0_7, %c0_8] : memref<24x8xf32, #tpu.memory_space<vmem>>, vector<24x8xf32>
    %c0_9 = arith.constant 0 : index
    %c0_10 = arith.constant 0 : index
    %7 = vector.load %arg4[%c0_9, %c0_10] : memref<8x32xf32, #tpu.memory_space<vmem>>, vector<8x32xf32>
    %cst_11 = arith.constant dense<0.000000e+00> : vector<24x32xf32>
    %8 = tpu.matmul %6, %7, %cst_11 {dimension_numbers = #tpu.dot_dimension_numbers<[1], [0], [0], [1], [0, 0, 1, 1], [], []>} : vector<24x8xf32>, vector<8x32xf32>, vector<24x32xf32> -> vector<24x32xf32>
    %9 = arith.addf %5, %8 : vector<24x32xf32>
    %10 = vector.broadcast %0 : vector<1x32xf32> to vector<24x32xf32>
    %11 = arith.addf %9, %10 : vector<24x32xf32>
    %cst_12 = arith.constant 0.000000e+00 : f32
    %12 = vector.broadcast %cst_12 : f32 to vector<24x32xf32>
    %13 = arith.maximumf %11, %12 : vector<24x32xf32>
    %c0_13 = arith.constant 0 : index
    %c0_14 = arith.constant 0 : index
    %14 = vector.load %arg5[%c0_13, %c0_14] : memref<32x32xf32, #tpu.memory_space<vmem>>, vector<32x32xf32>
    %cst_15 = arith.constant dense<0.000000e+00> : vector<24x32xf32>
    %15 = tpu.matmul %13, %14, %cst_15 {dimension_numbers = #tpu.dot_dimension_numbers<[1], [0], [0], [1], [0, 0, 1, 1], [], []>} : vector<24x32xf32>, vector<32x32xf32>, vector<24x32xf32> -> vector<24x32xf32>
    %16 = vector.broadcast %1 : vector<1x32xf32> to vector<24x32xf32>
    %17 = arith.addf %15, %16 : vector<24x32xf32>
    %cst_16 = arith.constant 0.000000e+00 : f32
    %18 = vector.broadcast %cst_16 : f32 to vector<24x32xf32>
    %19 = arith.maximumf %17, %18 : vector<24x32xf32>
    %cst_17 = arith.constant dense<0.000000e+00> : vector<1x24xf32>
    %20 = tpu.matmul %2, %19, %cst_17 {dimension_numbers = #tpu.dot_dimension_numbers<[1], [1], [0], [0], [0, 0, 1, 0], [], []>} : vector<1x32xf32>, vector<24x32xf32>, vector<1x24xf32> -> vector<1x24xf32>
    %c0_18 = arith.constant 0 : index
    %c0_19 = arith.constant 0 : index
    %21 = memref.load %arg7[%c0_18, %c0_19] : memref<1x1xf32, #tpu.memory_space<smem>>
    %22 = vector.broadcast %21 : f32 to vector<1x24xf32>
    %23 = arith.addf %20, %22 : vector<1x24xf32>
    %c0_20 = arith.constant 0 : index
    %c0_21 = arith.constant 0 : index
    %24 = vector.load %arg8[%c0_20, %c0_21] : memref<1x24xf32, #tpu.memory_space<vmem>>, vector<1x24xf32>
    tpu.vector_store %arg8[%c0_20, %c0_21], %23 {strides = array<i32>} : memref<1x24xf32, #tpu.memory_space<vmem>>, vector<1x24xf32>,
    return
  }
  func.func @transform_0(%arg0: i32) -> (i32, i32) {
    %c0_i32 = arith.constant 0 : i32
    %c0_i32_0 = arith.constant 0 : i32
    return %arg0, %c0_i32 : i32, i32
  }
  func.func @transform_1(%arg0: i32) -> (i32, i32) {
    %c0_i32 = arith.constant 0 : i32
    %c0_i32_0 = arith.constant 0 : i32
    return %arg0, %c0_i32 : i32, i32
  }
  func.func @transform_2(%arg0: i32) -> (i32, i32) {
    %c0_i32 = arith.constant 0 : i32
    %c0_i32_0 = arith.constant 0 : i32
    %c0_i32_1 = arith.constant 0 : i32
    return %c0_i32, %c0_i32_0 : i32, i32
  }
  func.func @transform_3(%arg0: i32) -> (i32, i32) {
    %c0_i32 = arith.constant 0 : i32
    %c0_i32_0 = arith.constant 0 : i32
    %c0_i32_1 = arith.constant 0 : i32
    return %c0_i32, %c0_i32_0 : i32, i32
  }
  func.func @transform_4(%arg0: i32) -> (i32, i32) {
    %c0_i32 = arith.constant 0 : i32
    %c0_i32_0 = arith.constant 0 : i32
    %c0_i32_1 = arith.constant 0 : i32
    return %c0_i32, %c0_i32_0 : i32, i32
  }
  func.func @transform_5(%arg0: i32) -> (i32, i32) {
    %c0_i32 = arith.constant 0 : i32
    %c0_i32_0 = arith.constant 0 : i32
    %c0_i32_1 = arith.constant 0 : i32
    return %c0_i32, %c0_i32_0 : i32, i32
  }
  func.func @transform_6(%arg0: i32) -> (i32, i32) {
    %c0_i32 = arith.constant 0 : i32
    %c0_i32_0 = arith.constant 0 : i32
    %c0_i32_1 = arith.constant 0 : i32
    return %c0_i32, %c0_i32_0 : i32, i32
  }
  func.func @transform_7(%arg0: i32) -> (i32, i32) {
    %c0_i32 = arith.constant 0 : i32
    %c0_i32_0 = arith.constant 0 : i32
    return %c0_i32, %arg0 : i32, i32
  }
}

</mosaic_0001>

<llo_original>
// kernel: tpu_custom_call.1
$region0: #{tpu_custom_call.1}
  #allocation0 [shape = 'u32[]', space=smem, size = 0x4, offset = 0x4, fixed_abs, tag = 'smem constant byte address 0x4 - core index']
  #allocation1 [shape = 'u32[144,128]{1,0:T(1,128)}', space=vmem, size = 0x12000, scoped, tag = 'internal scratch']
  #allocation2 [shape = 'f32[1,1]{1,0:T(1,128)S(6)}', space=smem, size = 0x200, scoped, tag = 'scoped memory for tpu_custom_call.1']
  %s0 = inlined_call_operand.hbm [shape: f32[24,24], index: 0, kind: input, shape index: {}]
  %s1 = inlined_call_operand.vmem [shape: f32[24,8], index: 1, kind: input, shape index: {}]
  %s2 = inlined_call_operand.hbm [shape: f32[24,32], index: 2, kind: input, shape index: {}]
  %s3 = inlined_call_operand.vmem [shape: f32[8,32], index: 3, kind: input, shape index: {}]
  %s4 = inlined_call_operand.vmem [shape: f32[32,32], index: 4, kind: input, shape index: {}]
  %s5 = inlined_call_operand.hbm [shape: f32[3,32], index: 5, kind: input, shape index: {}]
  %s6 = inlined_call_operand.<no memory space> [shape: f32[1,1], index: 6, kind: input, shape index: {}]
  %s7 = inlined_call_operand.hbm [shape: f32[1,24], index: 7, kind: output, shape index: {}]
  %s8 = sld [smem:[#allocation0]]
  $region50: #{tpu_custom_call.1} parent=0
    _
  %s10 = ssub.s32 1, %s8
  %s11 = scalar_select 0, %s10, %s8
  %12 = sst [smem:[#allocation2]] %s6
  $region1: #{tpu_custom_call.1} parent=0
    #allocation3 [shape = 'u8[12288]{0}', space=vmem, size = 0x3000, scoped, tag = 'input window, operand 0, single buffered']
    #allocation4 [shape = 's32[1]{0}', space=sflag, size = 0x4, scoped, tag = 'scoped memory for tpu_custom_call.1']
    #allocation5 [shape = 's32[1]{0}', space=sflag, size = 0x4, scoped, tag = 'scoped memory for tpu_custom_call.1']
    #allocation6 [shape = 'u8[12288]{0}', space=vmem, size = 0x3000, scoped, tag = 'input window, operand 2, single buffered']
    #allocation7 [shape = 's32[1]{0}', space=sflag, size = 0x4, scoped, tag = 'scoped memory for tpu_custom_call.1']
    #allocation8 [shape = 'u8[2048]{0}', space=vmem, size = 0x800, scoped, tag = 'input window, operand 5, single buffered']
    #allocation9 [shape = 'u8[512]{0}', space=vmem, size = 0x400, scoped, tag = 'output window, operand 0, single buffered']
    %13 = vsyncpa [#allocation4], 0
    %14 = vsyncpa [#allocation7], 0
    %15 = vsyncpa [#allocation5], 0
    // Predicated region
    $region2: #{tpu_custom_call.1} parent=1 // pred_check
      _
    $region3: #{tpu_custom_call.1} parent=1 // pred_check_branch
      %17 = sbr.rel (0) target = $region5
    $region4: #{tpu_custom_call.1} parent=1 // pred_region
      %s19 = ssub.s32 384, 384
      %20 = vsyncadd [#allocation4], %s19
      %s21 = sshll.u32 [#allocation3], 4
      %s22 = int_to_ptr.vmem [resolvable:$true] %s21
      %27 = dma.hbm_to_vmem [thread:$0]  %s0, 384, %s22, [#allocation4], 128, 128, 8
    $region5: #{tpu_custom_call.1} parent=1 // pred_fallthru
      _
    // Predicated region
    $region6: #{tpu_custom_call.1} parent=1 // pred_check
      _
    $region7: #{tpu_custom_call.1} parent=1 // pred_check_branch
      %29 = sbr.rel (0) target = $region9
    $region8: #{tpu_custom_call.1} parent=1 // pred_region
      _
    $region9: #{tpu_custom_call.1} parent=1 // pred_fallthru
      _
    // Predicated region
    $region10: #{tpu_custom_call.1} parent=1 // pred_check
      _
    $region11: #{tpu_custom_call.1} parent=1 // pred_check_branch
      %31 = sbr.rel (0) target = $region13
    $region12: #{tpu_custom_call.1} parent=1 // pred_region
      %s33 = ssub.s32 384, 384
      %34 = vsyncadd [#allocation7], %s33
      %s35 = sshll.u32 [#allocation6], 4
      %s36 = int_to_ptr.vmem [resolvable:$true] %s35
      %41 = dma.hbm_to_vmem [thread:$0]  %s2, 384, %s36, [#allocation7], 128, 128, 8
    $region13: #{tpu_custom_call.1} parent=1 // pred_fallthru
      _
    // Predicated region
    $region14: #{tpu_custom_call.1} parent=1 // pred_check
      _
    $region15: #{tpu_custom_call.1} parent=1 // pred_check_branch
      %43 = sbr.rel (0) target = $region17
    $region16: #{tpu_custom_call.1} parent=1 // pred_region
      _
    $region17: #{tpu_custom_call.1} parent=1 // pred_fallthru
      _
    // Predicated region
    $region18: #{tpu_custom_call.1} parent=1 // pred_check
      _
    $region19: #{tpu_custom_call.1} parent=1 // pred_check_branch
      %45 = sbr.rel (0) target = $region21
    $region20: #{tpu_custom_call.1} parent=1 // pred_region
      _
    $region21: #{tpu_custom_call.1} parent=1 // pred_fallthru
      _
    // Predicated region
    $region22: #{tpu_custom_call.1} parent=1 // pred_check
      _
    $region23: #{tpu_custom_call.1} parent=1 // pred_check_branch
      %47 = sbr.rel (0) target = $region25
    $region24: #{tpu_custom_call.1} parent=1 // pred_region
      %s49 = ssub.s32 64, 64
      %50 = vsyncadd [#allocation7], %s49
      %s52 = sshll.u32 [#allocation8], 4
      %s53 = int_to_ptr.vmem [resolvable:$true] %s52
      %55 = dma.hbm_to_vmem [thread:$0]  %s5, 64, %s53, [#allocation7]
    $region25: #{tpu_custom_call.1} parent=1 // pred_fallthru
      _
    // Predicated region
    $region26: #{tpu_custom_call.1} parent=1 // pred_check
      _
    $region27: #{tpu_custom_call.1} parent=1 // pred_check_branch
      %57 = sbr.rel (0) target = $region29
    $region28: #{tpu_custom_call.1} parent=1 // pred_region
      _
    $region29: #{tpu_custom_call.1} parent=1 // pred_fallthru
      _
    // Predicated region
    $region30: #{tpu_custom_call.1} parent=1 // pred_check
      _
    $region31: #{tpu_custom_call.1} parent=1 // pred_check_branch
      %59 = sbr.rel (0) target = $region33
    $region32: #{tpu_custom_call.1} parent=1 // pred_region
      %60 = dma.done [#allocation4], 384
    $region33: #{tpu_custom_call.1} parent=1 // pred_fallthru
      _
    // Predicated region
    $region34: #{tpu_custom_call.1} parent=1 // pred_check
      _
    $region35: #{tpu_custom_call.1} parent=1 // pred_check_branch
      %62 = sbr.rel (0) target = $region37
    $region36: #{tpu_custom_call.1} parent=1 // pred_region
      %63 = dma.done [#allocation7], 384
    $region37: #{tpu_custom_call.1} parent=1 // pred_fallthru
      _
    // Predicated region
    $region38: #{tpu_custom_call.1} parent=1 // pred_check
      _
    $region39: #{tpu_custom_call.1} parent=1 // pred_check_branch
      %65 = sbr.rel (0) target = $region41
    $region40: #{tpu_custom_call.1} parent=1 // pred_region
      %66 = dma.done [#allocation7], 64
    $region41: #{tpu_custom_call.1} parent=1 // pred_fallthru
      _
    %v67 = vld [vmem:[#allocation8] sm:$0x1]
    %v68 = vld [vmem:[#allocation8 + $0x1] sm:$0x1]
    %v69 = vld [vmem:[#allocation8 + $0x2] sm:$0x1]
    %v70 = vld [vmem:[#allocation3] sm:$0xff]
    %v71 = vld [vmem:[#allocation3 + $0x8] sm:$0xff]
    %v72 = vld [vmem:[#allocation3 + $0x10] sm:$0xff]
    %v73 = vld [vmem:[#allocation6] sm:$0xff]
    %v74 = vld [vmem:[#allocation6 + $0x8] sm:$0xff]
    %v75 = vld [vmem:[#allocation6 + $0x10] sm:$0xff]
    %v76 = vld [vmem:[%s1] sm:$0xff]
    %v77 = vld [vmem:[%s1 + $0x8] sm:$0xff]
    %v78 = vld [vmem:[%s1 + $0x10] sm:$0xff]
    %v79 = vld [vmem:[%s3] sm:$0xff]
    %vm80 = vcmask 64512
    %v82 = vsel %vm80, %v76, 0
    %v85 = vsel %vm80, %v77, 0
    %v88 = vsel %vm80, %v78, 0
    %90 = vmatprep.subr.mxu0 0.0
    %91 = vmatpush1.msra.mxu0 0.0
    %92 = vmatprep.subr.mxu0 0.0
    %93 = vmatpush1.msra.mxu0 0.0
    %94 = vmatprep.subr.mxu0 0.0
    %95 = vmatpush1.msra.mxu0 0.0
    %96 = vmatprep.subr.mxu0 0.0
    %97 = vmatpush1.msra.mxu0 0.0
    %98 = vmatprep.subr.mxu0 0.0
    %99 = vmatpush1.msra.mxu0 0.0
    %100 = vmatprep.subr.mxu0 0.0
    %101 = vmatpush1.msra.mxu0 0.0
    %102 = vmatprep.subr.mxu0 0.0
    %103 = vmatpush1.msra.mxu0 0.0
    %104 = vmatprep.subr.mxu0 0.0
    %105 = vmatpush1.msra.mxu0 0.0
    %106 = vmatprep.subr.mxu0 0.0
    %107 = vmatpush1.msra.mxu0 0.0
    %108 = vmatprep.subr.mxu0 0.0
    %109 = vmatpush1.msra.mxu0 0.0
    %110 = vmatprep.subr.mxu0 0.0
    %111 = vmatpush1.msra.mxu0 0.0
    %112 = vmatprep.subr.mxu0 0.0
    %113 = vmatpush1.msra.mxu0 0.0
    %114 = vmatprep.subr.mxu0 0.0
    %115 = vmatpush1.msra.mxu0 0.0
    %116 = vmatprep.subr.mxu0 0.0
    %117 = vmatpush1.msra.mxu0 0.0
    %118 = vmatprep.subr.mxu0 0.0
    %119 = vmatpush1.msra.mxu0 0.0
    %120 = vmatprep.subr.mxu0 0.0
    %121 = vmatpush1.msra.mxu0 %v79
    %122 = vmatprep.subr.mxu0 0.0
    %123 = vmatpush2.msra.mxu0 0.0
    %124 = vmatprep.subr.mxu0 0.0
    %125 = vmatpush2.msra.mxu0 0.0
    %126 = vmatprep.subr.mxu0 0.0
    %127 = vmatpush2.msra.mxu0 0.0
    %128 = vmatprep.subr.mxu0 0.0
    %129 = vmatpush2.msra.mxu0 0.0
    %130 = vmatprep.subr.mxu0 0.0
    %131 = vmatpush2.msra.mxu0 0.0
    %132 = vmatprep.subr.mxu0 0.0
    %133 = vmatpush2.msra.mxu0 0.0
    %134 = vmatprep.subr.mxu0 0.0
    %135 = vmatpush2.msra.mxu0 0.0
    %136 = vmatprep.subr.mxu0 0.0
    %137 = vmatpush2.msra.mxu0 0.0
    %138 = vmatprep.subr.mxu0 0.0
    %139 = vmatpush2.msra.mxu0 0.0
    %140 = vmatprep.subr.mxu0 0.0
    %141 = vmatpush2.msra.mxu0 0.0
    %142 = vmatprep.subr.mxu0 0.0
    %143 = vmatpush2.msra.mxu0 0.0
    %144 = vmatprep.subr.mxu0 0.0
    %145 = vmatpush2.msra.mxu0 0.0
    %146 = vmatprep.subr.mxu0 0.0
    %147 = vmatpush2.msra.mxu0 0.0
    %148 = vmatprep.subr.mxu0 0.0
    %149 = vmatpush2.msra.mxu0 0.0
    %150 = vmatprep.subr.mxu0 0.0
    %151 = vmatpush2.msra.mxu0 0.0
    %152 = vmatprep.subr.mxu0 0.0
    %153 = vmatpush2.msra.mxu0 0.0
    %154 = vmatprep.mubr.f32.mxu0 0.0
    %155 = vmatmul.mubr.f32.gmra.mxu0 %v82
    %v156 = vpop.f32.mrf.mxu0
    %v157 = vadd.f32 0.0, %v156
    %v158 = vpop.f32.mrf.mxu0
    %159 = vmatprep.mubr.f32.mxu0 0.0
    %160 = vmatmul.mubr.f32.gmra.mxu0 %v85
    %v161 = vpop.f32.mrf.mxu0
    %v162 = vadd.f32 0.0, %v161
    %v163 = vpop.f32.mrf.mxu0
    %164 = vmatprep.mubr.f32.mxu0 0.0
    %165 = vmatmul.mubr.f32.gmra.mxu0 %v88
    %v166 = vpop.f32.mrf.mxu0
    %v167 = vadd.f32 0.0, %v166
    %v168 = vpop.f32.mrf.mxu0
    %169 = vdwg.mxu0
    %vm170 = vcmask 195584
    %v172 = vsel %vm170, %v70, 0
    %v175 = vsel %vm170, %v71, 0
    %v178 = vsel %vm170, %v72, 0
    %180 = vmatprep.subr.mxu0 0.0
    %181 = vmatpush1.msra.mxu0 0.0
    %182 = vmatprep.subr.mxu0 0.0
    %183 = vmatpush1.msra.mxu0 0.0
    %184 = vmatprep.subr.mxu0 0.0
    %185 = vmatpush1.msra.mxu0 0.0
    %186 = vmatprep.subr.mxu0 0.0
    %187 = vmatpush1.msra.mxu0 0.0
    %188 = vmatprep.subr.mxu0 0.0
    %189 = vmatpush1.msra.mxu0 0.0
    %190 = vmatprep.subr.mxu0 0.0
    %191 = vmatpush1.msra.mxu0 0.0
    %192 = vmatprep.subr.mxu0 0.0
    %193 = vmatpush1.msra.mxu0 0.0
    %194 = vmatprep.subr.mxu0 0.0
    %195 = vmatpush1.msra.mxu0 0.0
    %196 = vmatprep.subr.mxu0 0.0
    %197 = vmatpush1.msra.mxu0 0.0
    %198 = vmatprep.subr.mxu0 0.0
    %199 = vmatpush1.msra.mxu0 0.0
    %200 = vmatprep.subr.mxu0 0.0
    %201 = vmatpush1.msra.mxu0 0.0
    %202 = vmatprep.subr.mxu0 0.0
    %203 = vmatpush1.msra.mxu0 0.0
    %204 = vmatprep.subr.mxu0 0.0
    %205 = vmatpush1.msra.mxu0 0.0
    %206 = vmatprep.subr.mxu0 0.0
    %207 = vmatpush1.msra.mxu0 %v75
    %208 = vmatprep.subr.mxu0 0.0
    %209 = vmatpush1.msra.mxu0 %v74
    %210 = vmatprep.subr.mxu0 0.0
    %211 = vmatpush1.msra.mxu0 %v73
    %212 = vmatprep.subr.mxu0 0.0
    %213 = vmatpush2.msra.mxu0 0.0
    %214 = vmatprep.subr.mxu0 0.0
    %215 = vmatpush2.msra.mxu0 0.0
    %216 = vmatprep.subr.mxu0 0.0
    %217 = vmatpush2.msra.mxu0 0.0
    %218 = vmatprep.subr.mxu0 0.0
    %219 = vmatpush2.msra.mxu0 0.0
    %220 = vmatprep.subr.mxu0 0.0
    %221 = vmatpush2.msra.mxu0 0.0
    %222 = vmatprep.subr.mxu0 0.0
    %223 = vmatpush2.msra.mxu0 0.0
    %224 = vmatprep.subr.mxu0 0.0
    %225 = vmatpush2.msra.mxu0 0.0
    %226 = vmatprep.subr.mxu0 0.0
    %227 = vmatpush2.msra.mxu0 0.0
    %228 = vmatprep.subr.mxu0 0.0
    %229 = vmatpush2.msra.mxu0 0.0
    %230 = vmatprep.subr.mxu0 0.0
    %231 = vmatpush2.msra.mxu0 0.0
    %232 = vmatprep.subr.mxu0 0.0
    %233 = vmatpush2.msra.mxu0 0.0
    %234 = vmatprep.subr.mxu0 0.0
    %235 = vmatpush2.msra.mxu0 0.0
    %236 = vmatprep.subr.mxu0 0.0
    %237 = vmatpush2.msra.mxu0 0.0
    %238 = vmatprep.subr.mxu0 0.0
    %239 = vmatpush2.msra.mxu0 0.0
    %240 = vmatprep.subr.mxu0 0.0
    %241 = vmatpush2.msra.mxu0 0.0
    %242 = vmatprep.subr.mxu0 0.0
    %243 = vmatpush2.msra.mxu0 0.0
    %244 = vmatprep.mubr.f32.mxu0 0.0
    %245 = vmatmul.mubr.f32.gmra.mxu0 %v172
    %v246 = vpop.f32.mrf.mxu0
    %v247 = vadd.f32 %v157, %v246
    %v248 = vpop.f32.mrf.mxu0
    %249 = vmatprep.mubr.f32.mxu0 0.0
    %250 = vmatmul.mubr.f32.gmra.mxu0 %v175
    %v251 = vpop.f32.mrf.mxu0
    %v252 = vadd.f32 %v162, %v251
    %v253 = vpop.f32.mrf.mxu0
    %254 = vmatprep.mubr.f32.mxu0 0.0
    %255 = vmatmul.mubr.f32.gmra.mxu0 %v178
    %v256 = vpop.f32.mrf.mxu0
    %v257 = vadd.f32 %v167, %v256
    %v258 = vpop.f32.mrf.mxu0
    %259 = vdwg.mxu0
    %v260 = vlaneseq
    %v261 = vshrl.u32 %v260, 7
    %v262 = vsub.s32 0, %v261
    %v263 = vrot.slane %v67, %v262
    %v264 = vadd.f32 %v247, %v263
    %v265 = vadd.f32 %v252, %v263
    %v266 = vadd.f32 %v257, %v263
    %v267 = vmax.f32 %v264, 0.0
    %v268 = vmax.f32 %v265, 0.0
    %v269 = vmax.f32 %v266, 0.0
    %v270 = vld [vmem:[%s4] sm:$0xff]
    %v271 = vld [vmem:[%s4 + $0x8] sm:$0xff]
    %v272 = vld [vmem:[%s4 + $0x10] sm:$0xff]
    %v273 = vld [vmem:[%s4 + $0x18] sm:$0xff]
    %v274 = vlaneseq
    %v275 = vshrl.u32 %v274, 7
    %v276 = vsub.s32 0, %v275
    %v277 = vrot.slane %v68, %v276
    %vm278 = vcmask 261120
    %v280 = vsel %vm278, %v267, 0
    %v283 = vsel %vm278, %v268, 0
    %v286 = vsel %vm278, %v269, 0
    %288 = vmatprep.subr.mxu0 0.0
    %289 = vmatpush1.msra.mxu0 0.0
    %290 = vmatprep.subr.mxu0 0.0
    %291 = vmatpush1.msra.mxu0 0.0
    %292 = vmatprep.subr.mxu0 0.0
    %293 = vmatpush1.msra.mxu0 0.0
    %294 = vmatprep.subr.mxu0 0.0
    %295 = vmatpush1.msra.mxu0 0.0
    %296 = vmatprep.subr.mxu0 0.0
    %297 = vmatpush1.msra.mxu0 0.0
    %298 = vmatprep.subr.mxu0 0.0
    %299 = vmatpush1.msra.mxu0 0.0
    %300 = vmatprep.subr.mxu0 0.0
    %301 = vmatpush1.msra.mxu0 0.0
    %302 = vmatprep.subr.mxu0 0.0
    %303 = vmatpush1.msra.mxu0 0.0
    %304 = vmatprep.subr.mxu0 0.0
    %305 = vmatpush1.msra.mxu0 0.0
    %306 = vmatprep.subr.mxu0 0.0
    %307 = vmatpush1.msra.mxu0 0.0
    %308 = vmatprep.subr.mxu0 0.0
    %309 = vmatpush1.msra.mxu0 0.0
    %310 = vmatprep.subr.mxu0 0.0
    %311 = vmatpush1.msra.mxu0 0.0
    %312 = vmatprep.subr.mxu0 0.0
    %313 = vmatpush1.msra.mxu0 %v273
    %314 = vmatprep.subr.mxu0 0.0
    %315 = vmatpush1.msra.mxu0 %v272
    %316 = vmatprep.subr.mxu0 0.0
    %317 = vmatpush1.msra.mxu0 %v271
    %318 = vmatprep.subr.mxu0 0.0
    %319 = vmatpush1.msra.mxu0 %v270
    %320 = vmatprep.subr.mxu0 0.0
    %321 = vmatpush2.msra.mxu0 0.0
    %322 = vmatprep.subr.mxu0 0.0
    %323 = vmatpush2.msra.mxu0 0.0
    %324 = vmatprep.subr.mxu0 0.0
    %325 = vmatpush2.msra.mxu0 0.0
    %326 = vmatprep.subr.mxu0 0.0
    %327 = vmatpush2.msra.mxu0 0.0
    %328 = vmatprep.subr.mxu0 0.0
    %329 = vmatpush2.msra.mxu0 0.0
    %330 = vmatprep.subr.mxu0 0.0
    %331 = vmatpush2.msra.mxu0 0.0
    %332 = vmatprep.subr.mxu0 0.0
    %333 = vmatpush2.msra.mxu0 0.0
    %334 = vmatprep.subr.mxu0 0.0
    %335 = vmatpush2.msra.mxu0 0.0
    %336 = vmatprep.subr.mxu0 0.0
    %337 = vmatpush2.msra.mxu0 0.0
    %338 = vmatprep.subr.mxu0 0.0
    %339 = vmatpush2.msra.mxu0 0.0
    %340 = vmatprep.subr.mxu0 0.0
    %341 = vmatpush2.msra.mxu0 0.0
    %342 = vmatprep.subr.mxu0 0.0
    %343 = vmatpush2.msra.mxu0 0.0
    %344 = vmatprep.subr.mxu0 0.0
    %345 = vmatpush2.msra.mxu0 0.0
    %346 = vmatprep.subr.mxu0 0.0
    %347 = vmatpush2.msra.mxu0 0.0
    %348 = vmatprep.subr.mxu0 0.0
    %349 = vmatpush2.msra.mxu0 0.0
    %350 = vmatprep.subr.mxu0 0.0
    %351 = vmatpush2.msra.mxu0 0.0
    %352 = vmatprep.mubr.f32.mxu0 0.0
    %353 = vmatmul.mubr.f32.gmra.mxu0 %v280
    %v354 = vpop.f32.mrf.mxu0
    %v355 = vadd.f32 %v277, %v354
    %v356 = vpop.f32.mrf.mxu0
    %357 = vmatprep.mubr.f32.mxu0 0.0
    %358 = vmatmul.mubr.f32.gmra.mxu0 %v283
    %v359 = vpop.f32.mrf.mxu0
    %v360 = vadd.f32 %v277, %v359
    %v361 = vpop.f32.mrf.mxu0
    %362 = vmatprep.mubr.f32.mxu0 0.0
    %363 = vmatmul.mubr.f32.gmra.mxu0 %v286
    %v364 = vpop.f32.mrf.mxu0
    %v365 = vadd.f32 %v277, %v364
    %v366 = vpop.f32.mrf.mxu0
    %367 = vdwg.mxu0
    %v368 = vmax.f32 %v355, 0.0
    %v369 = vmax.f32 %v360, 0.0
    %v370 = vmax.f32 %v365, 0.0
    %s371 = sld [smem:[#allocation2]]
    %v372 = vstv %s371
    %v374 = vsel %vm278, %v69, 0
    %v377 = vsel %vm278, %v368, 0
    %v380 = vsel %vm278, %v369, 0
    %v383 = vsel %vm278, %v370, 0
    %385 = vmatprep.subr.mxu0 0.0
    %386 = vmatpush1.xpose.msra.mxu0 0.0
    %387 = vmatprep.subr.mxu0 0.0
    %388 = vmatpush1.xpose.msra.mxu0 0.0
    %389 = vmatprep.subr.mxu0 0.0
    %390 = vmatpush1.xpose.msra.mxu0 0.0
    %391 = vmatprep.subr.mxu0 0.0
    %392 = vmatpush1.xpose.msra.mxu0 0.0
    %393 = vmatprep.subr.mxu0 0.0
    %394 = vmatpush1.xpose.msra.mxu0 0.0
    %395 = vmatprep.subr.mxu0 0.0
    %396 = vmatpush1.xpose.msra.mxu0 0.0
    %397 = vmatprep.subr.mxu0 0.0
    %398 = vmatpush1.xpose.msra.mxu0 0.0
    %399 = vmatprep.subr.mxu0 0.0
    %400 = vmatpush1.xpose.msra.mxu0 0.0
    %401 = vmatprep.subr.mxu0 0.0
    %402 = vmatpush1.xpose.msra.mxu0 0.0
    %403 = vmatprep.subr.mxu0 0.0
    %404 = vmatpush1.xpose.msra.mxu0 0.0
    %405 = vmatprep.subr.mxu0 0.0
    %406 = vmatpush1.xpose.msra.mxu0 0.0
    %407 = vmatprep.subr.mxu0 0.0
    %408 = vmatpush1.xpose.msra.mxu0 0.0
    %409 = vmatprep.subr.mxu0 0.0
    %410 = vmatpush1.xpose.msra.mxu0 0.0
    %411 = vmatprep.subr.mxu0 0.0
    %412 = vmatpush1.xpose.msra.mxu0 %v383
    %413 = vmatprep.subr.mxu0 0.0
    %414 = vmatpush1.xpose.msra.mxu0 %v380
    %415 = vmatprep.subr.mxu0 0.0
    %416 = vmatpush1.xpose.msra.mxu0 %v377
    %417 = vmatprep.subr.mxu0 0.0
    %418 = vmatpush2.xpose.msra.mxu0 0.0
    %419 = vmatprep.subr.mxu0 0.0
    %420 = vmatpush2.xpose.msra.mxu0 0.0
    %421 = vmatprep.subr.mxu0 0.0
    %422 = vmatpush2.xpose.msra.mxu0 0.0
    %423 = vmatprep.subr.mxu0 0.0
    %424 = vmatpush2.xpose.msra.mxu0 0.0
    %425 = vmatprep.subr.mxu0 0.0
    %426 = vmatpush2.xpose.msra.mxu0 0.0
    %427 = vmatprep.subr.mxu0 0.0
    %428 = vmatpush2.xpose.msra.mxu0 0.0
    %429 = vmatprep.subr.mxu0 0.0
    %430 = vmatpush2.xpose.msra.mxu0 0.0
    %431 = vmatprep.subr.mxu0 0.0
    %432 = vmatpush2.xpose.msra.mxu0 0.0
    %433 = vmatprep.subr.mxu0 0.0
    %434 = vmatpush2.xpose.msra.mxu0 0.0
    %435 = vmatprep.subr.mxu0 0.0
    %436 = vmatpush2.xpose.msra.mxu0 0.0
    %437 = vmatprep.subr.mxu0 0.0
    %438 = vmatpush2.xpose.msra.mxu0 0.0
    %439 = vmatprep.subr.mxu0 0.0
    %440 = vmatpush2.xpose.msra.mxu0 0.0
    %441 = vmatprep.subr.mxu0 0.0
    %442 = vmatpush2.xpose.msra.mxu0 0.0
    %443 = vmatprep.subr.mxu0 0.0
    %444 = vmatpush2.xpose.msra.mxu0 0.0
    %445 = vmatprep.subr.mxu0 0.0
    %446 = vmatpush2.xpose.msra.mxu0 0.0
    %447 = vmatprep.subr.mxu0 0.0
    %448 = vmatpush2.xpose.msra.mxu0 0.0
    %449 = vmatprep.mubr.f32.mxu0 0.0
    %450 = vmatmul.mubr.f32.gmra.mxu0 %v374
    %v451 = vpop.f32.mrf.mxu0
    %v452 = vadd.f32 %v372, %v451
    %v453 = vpop.f32.mrf.mxu0
    %454 = vdwg.mxu0
    %vm455 = vcmask 188416
    %456 = vst.msk [vmem:[#allocation9] sm:$0x1] %vm455, %v452
    // Predicated region
    $region42: #{tpu_custom_call.1} parent=1 // pred_check
      _
    $region43: #{tpu_custom_call.1} parent=1 // pred_check_branch
      %458 = sbr.rel (0) target = $region45
    $region44: #{tpu_custom_call.1} parent=1 // pred_region
      %s460 = ssub.s32 16, 16
      %461 = vsyncadd [#allocation5], %s460
      %s463 = sshll.u32 [#allocation9], 4
      %s464 = int_to_ptr.vmem [resolvable:$true] %s463
      %466 = dma.vmem_to_hbm [thread:$0]  %s464, 16, %s7, [#allocation5]
    $region45: #{tpu_custom_call.1} parent=1 // pred_fallthru
      _
    // Predicated region
    $region46: #{tpu_custom_call.1} parent=1 // pred_check
      _
    $region47: #{tpu_custom_call.1} parent=1 // pred_check_branch
      %468 = sbr.rel (0) target = $region49
    $region48: #{tpu_custom_call.1} parent=1 // pred_region
      %469 = dma.done [#allocation5], 16
    $region49: #{tpu_custom_call.1} parent=1 // pred_fallthru
      _
    %470 = vsyncpa [#allocation4], 1
    %471 = vsyncpa [#allocation7], 1
    %472 = vsyncpa [#allocation5], 1

</llo_original>
